<compile_context>
chip_gen: v7x
topology: tpu7x:2x2x1
jax: 0.10.0
libtpu: 0.0.40
codegen_flags: <defaults>
</compile_context>

<pallas_src>
import functools

import jax
import jax.numpy as jnp
from jax.experimental import pallas as pl
from jax.experimental.pallas import tpu as pltpu

EPS = 1e-5
LANE = 128


def _pick_batch_tile(batch):
    for tb in (256, 128, 64, 32, 16, 8):
        if batch % tb == 0:
            return tb
    return batch  # tiny batch: single full-batch tile


def _pad_lanes(a, axis):
    """Zero-pad `axis` up to a multiple of 128 (no-op if already lane-dense)."""
    pad = (-a.shape[axis]) % LANE
    if pad == 0:
        return a
    widths = [(0, 0)] * a.ndim
    widths[axis] = (0, pad)
    return jnp.pad(a, widths)


# ---- stage 1: h = x @ w1 (bf16 MXU, f32 acc) + per-feature sum / sum-of-squares for BN1 ----
def _linear_stats_kernel(x_ref, w_ref, h_ref, sum_ref, sq_ref):
    h = jnp.dot(x_ref[...], w_ref[...], preferred_element_type=jnp.float32)
    h_ref[...] = h

    @pl.when(pl.program_id(1) == 0)   # first batch tile of this column block
    def _():
        sum_ref[...] = jnp.zeros_like(sum_ref)
        sq_ref[...] = jnp.zeros_like(sq_ref)

    sum_ref[...] += jnp.sum(h, axis=0, keepdims=True)
    sq_ref[...] += jnp.sum(h * h, axis=0, keepdims=True)


# ---- stage 2: BN1 (fused scale/shift) -> ReLU -> o = h @ w2 (bf16 MXU) + stats for BN2 ----
def _bn_relu_linear_stats_kernel(h_ref, sum1_ref, sq1_ref, g_ref, b_ref, w2_ref,
                                 o_ref, sum2_ref, sq2_ref, *, inv_batch):
    mean = sum1_ref[...] * inv_batch
    var = jnp.maximum(sq1_ref[...] * inv_batch - mean * mean, 0.0)
    scale = g_ref[...] * jax.lax.rsqrt(var + EPS)       # rsqrt rides the EUP slot
    shift = b_ref[...] - mean * scale
    h = jnp.maximum(h_ref[...] * scale + shift, 0.0)    # fused BN affine + ReLU (f32 VPU)
    o = jnp.dot(h.astype(jnp.bfloat16), w2_ref[...], preferred_element_type=jnp.float32)
    o_ref[...] = o

    @pl.when(pl.program_id(1) == 0)
    def _():
        sum2_ref[...] = jnp.zeros_like(sum2_ref)
        sq2_ref[...] = jnp.zeros_like(sq2_ref)

    sum2_ref[...] += jnp.sum(o, axis=0, keepdims=True)
    sq2_ref[...] += jnp.sum(o * o, axis=0, keepdims=True)


# ---- stage 3: BN2 (affine=False), elementwise per batch tile -> fully parallel ----
def _bn_final_kernel(o_ref, sum2_ref, sq2_ref, out_ref, *, inv_batch):
    mean = sum2_ref[...] * inv_batch
    var = jnp.maximum(sq2_ref[...] * inv_batch - mean * mean, 0.0)
    out_ref[...] = ((o_ref[...] - mean) * jax.lax.rsqrt(var + EPS)).astype(out_ref.dtype)


def projection_head(x, w1, gamma1, beta1, w2):
    """x: [B, Din] f32; w1: [Din, H]; gamma1/beta1: [1, H]; w2: [H, Dout] (all f32 params)."""
    B, Din = x.shape
    H = w1.shape[1]
    Dout = w2.shape[1]

    # Lane-dense feature dims (zero padding is exact: padded BN columns normalize to 0 and padded
    # w2 rows/cols contribute nothing).
    w1p = _pad_lanes(w1, 1)
    g1p = _pad_lanes(gamma1, 1)
    b1p = _pad_lanes(beta1, 1)
    w2p = _pad_lanes(_pad_lanes(w2, 1), 0)
    Hp = w1p.shape[1]
    Dp = w2p.shape[1]

    # bf16 MXU operands; accumulation stays f32 inside the kernels.
    xb = x.astype(jnp.bfloat16)
    w1b = w1p.astype(jnp.bfloat16)
    w2b = w2p.astype(jnp.bfloat16)

    tb = _pick_batch_tile(B)
    nb = B // tb
    nh = Hp // LANE
    nd = Dp // LANE
    inv_b = 1.0 / B

    # ---- stage 1: h + BN1 stats ----
    h, s1, q1 = pl.pallas_call(
        _linear_stats_kernel,
        out_shape=(jax.ShapeDtypeStruct((B, Hp), jnp.float32),
                   jax.ShapeDtypeStruct((1, Hp), jnp.float32),
                   jax.ShapeDtypeStruct((1, Hp), jnp.float32)),
        grid=(nh, nb),
        in_specs=[pl.BlockSpec((tb, Din), lambda j, i: (i, 0)),
                  pl.BlockSpec((Din, LANE), lambda j, i: (0, j))],
        out_specs=(pl.BlockSpec((tb, LANE), lambda j, i: (i, j)),
                   pl.BlockSpec((1, LANE), lambda j, i: (0, j)),
                   pl.BlockSpec((1, LANE), lambda j, i: (0, j))),
        compiler_params=pltpu.CompilerParams(
            dimension_semantics=("parallel", "arbitrary")),
    )(xb, w1b)

    # ---- stage 2: BN1 apply + ReLU + second matmul + BN2 stats ----
    o, s2, q2 = pl.pallas_call(
        functools.partial(_bn_relu_linear_stats_kernel, inv_batch=inv_b),
        out_shape=(jax.ShapeDtypeStruct((B, Dp), jnp.float32),
                   jax.ShapeDtypeStruct((1, Dp), jnp.float32),
                   jax.ShapeDtypeStruct((1, Dp), jnp.float32)),
        grid=(nd, nb),
        in_specs=[pl.BlockSpec((tb, Hp), lambda j, i: (i, 0)),
                  pl.BlockSpec((1, Hp), lambda j, i: (0, 0)),
                  pl.BlockSpec((1, Hp), lambda j, i: (0, 0)),
                  pl.BlockSpec((1, Hp), lambda j, i: (0, 0)),
                  pl.BlockSpec((1, Hp), lambda j, i: (0, 0)),
                  pl.BlockSpec((Hp, LANE), lambda j, i: (0, j))],
        out_specs=(pl.BlockSpec((tb, LANE), lambda j, i: (i, j)),
                   pl.BlockSpec((1, LANE), lambda j, i: (0, j)),
                   pl.BlockSpec((1, LANE), lambda j, i: (0, j))),
        compiler_params=pltpu.CompilerParams(
            dimension_semantics=("parallel", "arbitrary")),
    )(h, s1, q1, g1p, b1p, w2b)

    # ---- stage 3: BN2 apply ----
    out = pl.pallas_call(
        functools.partial(_bn_final_kernel, inv_batch=inv_b),
        out_shape=jax.ShapeDtypeStruct((B, Dp), jnp.float32),
        grid=(nb,),
        in_specs=[pl.BlockSpec((tb, Dp), lambda i: (i, 0)),
                  pl.BlockSpec((1, Dp), lambda i: (0, 0)),
                  pl.BlockSpec((1, Dp), lambda i: (0, 0))],
        out_specs=pl.BlockSpec((tb, Dp), lambda i: (i, 0)),
        compiler_params=pltpu.CompilerParams(
            dimension_semantics=("parallel",)),
    )(o, s2, q2)

    return out[:, :Dout] if Dp != Dout else out


def projection_head_ref(x, w1, gamma1, beta1, w2, mxu_dtype=jnp.float32):
    d = mxu_dtype
    h = jnp.dot(x.astype(d), w1.astype(d), preferred_element_type=jnp.float32)
    m1 = h.mean(0, keepdims=True)
    v1 = ((h - m1) ** 2).mean(0, keepdims=True)
    h = jnp.maximum((h - m1) / jnp.sqrt(v1 + EPS) * gamma1 + beta1, 0.0)
    o = jnp.dot(h.astype(d), w2.astype(d), preferred_element_type=jnp.float32)
    m2 = o.mean(0, keepdims=True)
    v2 = ((o - m2) ** 2).mean(0, keepdims=True)
    return (o - m2) / jnp.sqrt(v2 + EPS)


if __name__ == "__main__":
    # Small but lane-dense shapes consistent with the module family (output_dim=128 is the module default).
    B, input_dim, hidden_dim, output_dim = 512, 256, 256, 128

    key = jax.random.PRNGKey(0)
    kx, kw1, kg, kb, kw2 = jax.random.split(key, 5)

    x = jax.random.normal(kx, (B, input_dim), dtype=jnp.float32)
    # PyTorch stores Linear weight as [out, in]; we keep [in, out] so the kernel does x @ W.
    w1 = jax.random.normal(kw1, (input_dim, hidden_dim), dtype=jnp.float32) * (2.0 / input_dim) ** 0.5
    gamma1 = 1.0 + 0.1 * jax.random.normal(kg, (1, hidden_dim), dtype=jnp.float32)
    beta1 = 0.1 * jax.random.normal(kb, (1, hidden_dim), dtype=jnp.float32)
    w2 = jax.random.normal(kw2, (hidden_dim, output_dim), dtype=jnp.float32) * (2.0 / hidden_dim) ** 0.5

    out = projection_head(x, w1, gamma1, beta1, w2)
    jax.block_until_ready(out)
    assert out.shape == (B, output_dim)

    # Tight check vs a reference using the same bf16 MXU operands.
    ref_bf16 = projection_head_ref(x, w1, gamma1, beta1, w2, mxu_dtype=jnp.bfloat16)
    assert jnp.allclose(out, ref_bf16, atol=5e-3, rtol=5e-3), "mismatch vs bf16-matmul reference"

    # Loose check vs the full-f32 module semantics (bf16 MXU quantization is the only difference).
    ref_f32 = projection_head_ref(x, w1, gamma1, beta1, w2, mxu_dtype=jnp.float32)
    assert jnp.allclose(out, ref_f32, atol=1e-1, rtol=5e-2), "mismatch vs f32 reference"

    print("KERNEL_OK")
</pallas_src>

<mosaic_0001>
module attributes {stable_mosaic.version = 11 : i64} {
  func.func @_linear_stats_kernel(%arg0: i32, %arg1: i32, %arg2: memref<256x256xbf16, #tpu.memory_space<vmem>>, %arg3: memref<256x128xbf16, #tpu.memory_space<vmem>>, %arg4: memref<256x128xf32, #tpu.memory_space<vmem>>, %arg5: memref<1x128xf32, #tpu.memory_space<vmem>>, %arg6: memref<1x128xf32, #tpu.memory_space<vmem>>) attributes {dimension_semantics = [#tpu.dimension_semantics<parallel>, #tpu.dimension_semantics<arbitrary>], iteration_bounds = array<i64: 2, 2>, scalar_prefetch = 0 : i64, scratch_operands = 0 : i64, tpu.core_type = #tpu.core_type<tc>, window_params = [{transform_indices = @transform_0, window_bounds = array<i64: 256, 256>}, {transform_indices = @transform_1, window_bounds = array<i64: 256, 128>}, {transform_indices = @transform_2, window_bounds = array<i64: 256, 128>}, {transform_indices = @transform_3, window_bounds = array<i64: 1, 128>}, {transform_indices = @transform_4, window_bounds = array<i64: 1, 128>}]} {
    %c0 = arith.constant 0 : index
    %c0_0 = arith.constant 0 : index
    %0 = vector.load %arg2[%c0, %c0_0] : memref<256x256xbf16, #tpu.memory_space<vmem>>, vector<256x256xbf16>
    %c0_1 = arith.constant 0 : index
    %c0_2 = arith.constant 0 : index
    %1 = vector.load %arg3[%c0_1, %c0_2] : memref<256x128xbf16, #tpu.memory_space<vmem>>, vector<256x128xbf16>
    %cst = arith.constant dense<0.000000e+00> : vector<256x128xf32>
    %2 = tpu.matmul %0, %1, %cst {dimension_numbers = #tpu.dot_dimension_numbers<[1], [0], [0], [1], [0, 0, 1, 1], [], []>} : vector<256x256xbf16>, vector<256x128xbf16>, vector<256x128xf32> -> vector<256x128xf32>
    %c0_3 = arith.constant 0 : index
    %c0_4 = arith.constant 0 : index
    %3 = vector.load %arg4[%c0_3, %c0_4] : memref<256x128xf32, #tpu.memory_space<vmem>>, vector<256x128xf32>
    tpu.vector_store %arg4[%c0_3, %c0_4], %2 {strides = array<i32>} : memref<256x128xf32, #tpu.memory_space<vmem>>, vector<256x128xf32>,
    %c0_i32 = arith.constant 0 : i32
    %4 = arith.cmpi eq, %arg1, %c0_i32 : i32
    %5 = arith.extui %4 : i1 to i32
    %c0_i32_5 = arith.constant 0 : i32
    %6 = arith.cmpi ne, %5, %c0_i32_5 : i32
    scf.if %6 {
      %cst_16 = arith.constant 0.000000e+00 : f32
      %18 = vector.broadcast %cst_16 : f32 to vector<1x128xf32>
      %c0_17 = arith.constant 0 : index
      %c0_18 = arith.constant 0 : index
      %19 = vector.load %arg5[%c0_17, %c0_18] : memref<1x128xf32, #tpu.memory_space<vmem>>, vector<1x128xf32>
      tpu.vector_store %arg5[%c0_17, %c0_18], %18 {strides = array<i32>} : memref<1x128xf32, #tpu.memory_space<vmem>>, vector<1x128xf32>,
      %cst_19 = arith.constant 0.000000e+00 : f32
      %20 = vector.broadcast %cst_19 : f32 to vector<1x128xf32>
      %c0_20 = arith.constant 0 : index
      %c0_21 = arith.constant 0 : index
      %21 = vector.load %arg6[%c0_20, %c0_21] : memref<1x128xf32, #tpu.memory_space<vmem>>, vector<1x128xf32>
      tpu.vector_store %arg6[%c0_20, %c0_21], %20 {strides = array<i32>} : memref<1x128xf32, #tpu.memory_space<vmem>>, vector<1x128xf32>,
    } else {
    }
    %c0_6 = arith.constant 0 : index
    %c0_7 = arith.constant 0 : index
    %7 = vector.load %arg5[%c0_6, %c0_7] : memref<1x128xf32, #tpu.memory_space<vmem>>, vector<1x128xf32>
    %cst_8 = arith.constant dense<0.000000e+00> : vector<128xf32>
    %8 = vector.multi_reduction <add>, %2, %cst_8 [0] : vector<256x128xf32> to vector<128xf32>
    %9 = vector.shape_cast %8 : vector<128xf32> to vector<1x128xf32>
    %10 = arith.addf %7, %9 : vector<1x128xf32>
    %c0_9 = arith.constant 0 : index
    %c0_10 = arith.constant 0 : index
    %11 = vector.load %arg5[%c0_9, %c0_10] : memref<1x128xf32, #tpu.memory_space<vmem>>, vector<1x128xf32>
    tpu.vector_store %arg5[%c0_9, %c0_10], %10 {strides = array<i32>} : memref<1x128xf32, #tpu.memory_space<vmem>>, vector<1x128xf32>,
    %c0_11 = arith.constant 0 : index
    %c0_12 = arith.constant 0 : index
    %12 = vector.load %arg6[%c0_11, %c0_12] : memref<1x128xf32, #tpu.memory_space<vmem>>, vector<1x128xf32>
    %13 = arith.mulf %2, %2 : vector<256x128xf32>
    %cst_13 = arith.constant dense<0.000000e+00> : vector<128xf32>
    %14 = vector.multi_reduction <add>, %13, %cst_13 [0] : vector<256x128xf32> to vector<128xf32>
    %15 = vector.shape_cast %14 : vector<128xf32> to vector<1x128xf32>
    %16 = arith.addf %12, %15 : vector<1x128xf32>
    %c0_14 = arith.constant 0 : index
    %c0_15 = arith.constant 0 : index
    %17 = vector.load %arg6[%c0_14, %c0_15] : memref<1x128xf32, #tpu.memory_space<vmem>>, vector<1x128xf32>
    tpu.vector_store %arg6[%c0_14, %c0_15], %16 {strides = array<i32>} : memref<1x128xf32, #tpu.memory_space<vmem>>, vector<1x128xf32>,
    return
  }
  func.func @transform_0(%arg0: i32, %arg1: i32) -> (i32, i32) {
    %c0_i32 = arith.constant 0 : i32
    %c0_i32_0 = arith.constant 0 : i32
    return %arg1, %c0_i32 : i32, i32
  }
  func.func @transform_1(%arg0: i32, %arg1: i32) -> (i32, i32) {
    %c0_i32 = arith.constant 0 : i32
    %c0_i32_0 = arith.constant 0 : i32
    return %c0_i32, %arg0 : i32, i32
  }
  func.func @transform_2(%arg0: i32, %arg1: i32) -> (i32, i32) {
    %c0_i32 = arith.constant 0 : i32
    return %arg1, %arg0 : i32, i32
  }
  func.func @transform_3(%arg0: i32, %arg1: i32) -> (i32, i32) {
    %c0_i32 = arith.constant 0 : i32
    %c0_i32_0 = arith.constant 0 : i32
    return %c0_i32, %arg0 : i32, i32
  }
  func.func @transform_4(%arg0: i32, %arg1: i32) -> (i32, i32) {
    %c0_i32 = arith.constant 0 : i32
    %c0_i32_0 = arith.constant 0 : i32
    return %c0_i32, %arg0 : i32, i32
  }
}

</mosaic_0001>

<llo_original>
// kernel: tpu_custom_call.1
$region0: #{tpu_custom_call.1}
  #allocation0 [shape = 'u32[]', space=smem, size = 0x4, offset = 0x4, fixed_abs, tag = 'smem constant byte address 0x4 - core index']
  #allocation1 [shape = 'u32[144,128]{1,0:T(1,128)}', space=vmem, size = 0x12000, scoped, tag = 'internal scratch']
  %s0 = inlined_call_operand.hbm [shape: bf16[512,256], index: 0, kind: input, shape index: {}]
  %s1 = inlined_call_operand.hbm [shape: bf16[256,256], index: 1, kind: input, shape index: {}]
  %s2 = inlined_call_operand.hbm [shape: f32[512,256], index: 2, kind: output, shape index: {0}]
  %s3 = inlined_call_operand.hbm [shape: f32[1,256], index: 3, kind: output, shape index: {1}]
  %s4 = inlined_call_operand.hbm [shape: f32[1,256], index: 4, kind: output, shape index: {2}]
  %5 = xla_tuple %s2, %s3, %s4
  %s6 = sld [smem:[#allocation0]]
  $region69: #{tpu_custom_call.1} parent=0
    _
  %s8 = ssub.s32 1, %s6
  %s9 = scalar_select 0, %s8, %s6
  $region1: #{tpu_custom_call.1} parent=0
    #allocation2 [shape = 'u8[262144]{0}', space=vmem, size = 0x40000, scoped, tag = 'input window, operand 0']
    #allocation3 [shape = 's32[2]{0}', space=sflag, size = 0x8, scoped, tag = 'scoped memory for tpu_custom_call.1']
    #allocation4 [shape = 's32[2]{0}', space=sflag, size = 0x8, scoped, tag = 'scoped memory for tpu_custom_call.1']
    #allocation5 [shape = 'u8[131072]{0}', space=vmem, size = 0x20000, scoped, tag = 'input window, operand 1']
    #allocation6 [shape = 's32[2]{0}', space=sflag, size = 0x8, scoped, tag = 'scoped memory for tpu_custom_call.1']
    #allocation7 [shape = 'u8[262144]{0}', space=vmem, size = 0x40000, scoped, tag = 'output window, operand 0']
    #allocation8 [shape = 'u8[1024]{0}', space=vmem, size = 0x400, scoped, tag = 'output window, operand 1']
    #allocation9 [shape = 's32[2]{0}', space=sflag, size = 0x8, scoped, tag = 'scoped memory for tpu_custom_call.1']
    #allocation10 [shape = 'u8[1024]{0}', space=vmem, size = 0x400, scoped, tag = 'output window, operand 2']
    %10 = vsyncpa [#allocation3], 0
    %s11 = scalar_lea.sflag [#allocation3], 1
    %12 = vsyncpa %s11, 0
    %13 = vsyncpa [#allocation6], 0
    %s14 = scalar_lea.sflag [#allocation6], 1
    %15 = vsyncpa %s14, 0
    %16 = vsyncpa [#allocation4], 0
    %s17 = scalar_lea.sflag [#allocation4], 1
    %18 = vsyncpa %s17, 0
    %19 = vsyncpa [#allocation9], 0
    %s20 = scalar_lea.sflag [#allocation9], 1
    %21 = vsyncpa %s20, 0
    loop: start=0, step=1, limit=6
    $region2: #{tpu_custom_call.1} parent=1 // loop_pre_header
      _
    $region3: #{tpu_custom_call.1} parent=1 // loop_header
      %s23 = sphi 0, %s27
      %p24 = scmp.ge.s32.totalorder %s23, 6
      %s30 = sphi 0, %s42
      %s31 = sphi 0, %s38
      %s32 = sphi 0, %s30
      %s33 = sphi 0, %s31
      %s34 = sphi 0, %s32
      %s35 = sphi 0, %s33
      %s45 = sphi 0, %s47
      %s48 = sphi 0, %s45
      %s49 = sphi 0, %s48
      %s65 = sphi 0, %s49
      %s71 = sphi 0, %s73
      %s74 = sphi 0, %s71
      %s75 = sphi 0, %s74
      %s91 = sphi 0, %s75
      %s99 = sphi 0, %s101
      %s102 = sphi 0, %s99
      %s103 = sphi 0, %s102
      %s119 = sphi 0, %s103
      %s125 = sphi 0, %s127
      %s128 = sphi 0, %s125
      %s129 = sphi 0, %s128
      %s145 = sphi 0, %s129
      %s151 = sphi 0, %s153
      %s154 = sphi 0, %s151
      %s155 = sphi 0, %s154
      %s171 = sphi 0, %s155
    $region4: #{tpu_custom_call.1} parent=1 // loop_header_branch
      %26 = sbr.rel (%p24) target = $region8
    $region5: #{tpu_custom_call.1} parent=1 // loop_body
      %s28 = ssub.s32 %s23, 1
      %s29 = ssub.s32 %s23, 2
      %s36 = sadd.s32 1, %s31
      %p37 = scmp.ge.s32.totalorder %s36, 2
      %s38 = scalar_select %p37, 0, %s36
      %s39 = sadd.s32 1, %s30
      %s40 = scalar_select %p37, %s39, %s30
      %p41 = scmp.ge.s32.totalorder %s40, 2
      %s42 = scalar_select %p41, 0, %s40
      %s43 = ssub.s32 %s31, %s38
      %p44 = scmp.eq.s32.totalorder %s43, 0
      %s46 = sadd.s32 %s45, 1
      %s47 = scalar_select %p44, %s45, %s46
      %p50 = pneg %p44
      %p51 = scmp.eq.s32.totalorder %s23, 3
      %p52 = por %p50, %p51
      %p53 = scmp.ne.s32.totalorder %s45, %s48
      %p54 = scmp.eq.s32.totalorder %s23, 0
      %p55 = por %p53, %p54
      %p56 = scmp.ne.s32.totalorder %s45, %s48
      %p57 = scmp.eq.s32.totalorder %s28, 3
      %p58 = por %p56, %p57
      %p59 = scmp.ne.s32.totalorder %s48, %s49
      %p60 = scmp.eq.s32.totalorder %s28, 0
      %p61 = por %p59, %p60
      %p62 = scmp.ne.s32.totalorder %s48, %s49
      %p63 = scmp.eq.s32.totalorder %s29, 3
      %p64 = por %p62, %p63
      %p66 = scmp.ne.s32.totalorder %s49, %s65
      %p67 = scmp.eq.s32.totalorder %s29, 0
      %p68 = por %p66, %p67
      %s69 = ssub.s32 %s30, %s42
      %p70 = scmp.eq.s32.totalorder %s69, 0
      %s72 = sadd.s32 %s71, 1
      %s73 = scalar_select %p70, %s71, %s72
      %p76 = pneg %p70
      %p77 = scmp.eq.s32.totalorder %s23, 3
      %p78 = por %p76, %p77
      %p79 = scmp.ne.s32.totalorder %s71, %s74
      %p80 = scmp.eq.s32.totalorder %s23, 0
      %p81 = por %p79, %p80
      %p82 = scmp.ne.s32.totalorder %s71, %s74
      %p83 = scmp.eq.s32.totalorder %s28, 3
      %p84 = por %p82, %p83
      %p85 = scmp.ne.s32.totalorder %s74, %s75
      %p86 = scmp.eq.s32.totalorder %s28, 0
      %p87 = por %p85, %p86
      %p88 = scmp.ne.s32.totalorder %s74, %s75
      %p89 = scmp.eq.s32.totalorder %s29, 3
      %p90 = por %p88, %p89
      %p92 = scmp.ne.s32.totalorder %s75, %s91
      %p93 = scmp.eq.s32.totalorder %s29, 0
      %p94 = por %p92, %p93
      %s95 = ssub.s32 %s31, %s38
      %s96 = ssub.s32 %s30, %s42
      %s97 = sor.u32 %s95, %s96
      %p98 = scmp.eq.s32.totalorder %s97, 0
      %s100 = sadd.s32 %s99, 1
      %s101 = scalar_select %p98, %s99, %s100
      %p104 = pneg %p98
      %p105 = scmp.eq.s32.totalorder %s23, 3
      %p106 = por %p104, %p105
      %p107 = scmp.ne.s32.totalorder %s99, %s102
      %p108 = scmp.eq.s32.totalorder %s23, 0
      %p109 = por %p107, %p108
      %p110 = scmp.ne.s32.totalorder %s99, %s102
      %p111 = scmp.eq.s32.totalorder %s28, 3
      %p112 = por %p110, %p111
      %p113 = scmp.ne.s32.totalorder %s102, %s103
      %p114 = scmp.eq.s32.totalorder %s28, 0
      %p115 = por %p113, %p114
      %p116 = scmp.ne.s32.totalorder %s102, %s103
      %p117 = scmp.eq.s32.totalorder %s29, 3
      %p118 = por %p116, %p117
      %p120 = scmp.ne.s32.totalorder %s103, %s119
      %p121 = scmp.eq.s32.totalorder %s29, 0
      %p122 = por %p120, %p121
      %s123 = ssub.s32 %s30, %s42
      %p124 = scmp.eq.s32.totalorder %s123, 0
      %s126 = sadd.s32 %s125, 1
      %s127 = scalar_select %p124, %s125, %s126
      %p130 = pneg %p124
      %p131 = scmp.eq.s32.totalorder %s23, 3
      %p132 = por %p130, %p131
      %p133 = scmp.ne.s32.totalorder %s125, %s128
      %p134 = scmp.eq.s32.totalorder %s23, 0
      %p135 = por %p133, %p134
      %p136 = scmp.ne.s32.totalorder %s125, %s128
      %p137 = scmp.eq.s32.totalorder %s28, 3
      %p138 = por %p136, %p137
      %p139 = scmp.ne.s32.totalorder %s128, %s129
      %p140 = scmp.eq.s32.totalorder %s28, 0
      %p141 = por %p139, %p140
      %p142 = scmp.ne.s32.totalorder %s128, %s129
      %p143 = scmp.eq.s32.totalorder %s29, 3
      %p144 = por %p142, %p143
      %p146 = scmp.ne.s32.totalorder %s129, %s145
      %p147 = scmp.eq.s32.totalorder %s29, 0
      %p148 = por %p146, %p147
      %s149 = ssub.s32 %s30, %s42
      %p150 = scmp.eq.s32.totalorder %s149, 0
      %s152 = sadd.s32 %s151, 1
      %s153 = scalar_select %p150, %s151, %s152
      %p156 = pneg %p150
      %p157 = scmp.eq.s32.totalorder %s23, 3
      %p158 = por %p156, %p157
      %p159 = scmp.ne.s32.totalorder %s151, %s154
      %p160 = scmp.eq.s32.totalorder %s23, 0
      %p161 = por %p159, %p160
      %p162 = scmp.ne.s32.totalorder %s151, %s154
      %p163 = scmp.eq.s32.totalorder %s28, 3
      %p164 = por %p162, %p163
      %p165 = scmp.ne.s32.totalorder %s154, %s155
      %p166 = scmp.eq.s32.totalorder %s28, 0
      %p167 = por %p165, %p166
      %p168 = scmp.ne.s32.totalorder %s154, %s155
      %p169 = scmp.eq.s32.totalorder %s29, 3
      %p170 = por %p168, %p169
      %p172 = scmp.ne.s32.totalorder %s155, %s171
      %p173 = scmp.eq.s32.totalorder %s29, 0
      %p174 = por %p172, %p173
      %p175 = scmp.le.s32.totalorder 1, %s23
      %p176 = scmp.lt.s32.totalorder %s23, 5
      %p177 = pnand %p175, %p176
      %p178 = pneg %p177
      // Predicated region
      $region9: #{tpu_custom_call.1} parent=5 // pred_check
        _
      $region10: #{tpu_custom_call.1} parent=5 // pred_check_branch
        %180 = sbr.rel (%p177) target = $region12
      $region11: #{tpu_custom_call.1} parent=5 // pred_region
        %s181 = ssub.s32 %s23, 1
      $region12: #{tpu_custom_call.1} parent=5 // pred_fallthru
        _
      %p182 = scmp.lt.s32.totalorder %s23, 4
      // Predicated region
      $region13: #{tpu_custom_call.1} parent=5 // pred_check
        %p183 = pneg %p182
      $region14: #{tpu_custom_call.1} parent=5 // pred_check_branch
        %185 = sbr.rel (%p183) target = $region16
      $region15: #{tpu_custom_call.1} parent=5 // pred_region
        // Predicated region
        $region17: #{tpu_custom_call.1} parent=15 // pred_check
          %p186 = pneg %p55
        $region18: #{tpu_custom_call.1} parent=15 // pred_check_branch
          %188 = sbr.rel (%p186) target = $region20
        $region19: #{tpu_custom_call.1} parent=15 // pred_region
          %s189 = sand.u32 %s45, 1
          %s190 = scalar_lea.sflag [#allocation3], %s189
          %s191 = sand.u32 %s45, 1
          %s192 = smul.addr %s191, 256
          %s193 = scalar_lea.vmem [#allocation2], %s192
          %s194 = smul.u32 32, %s31
          %s196 = ssub.s32 4096, 4096
          %197 = vsyncadd %s190, %s196
          %s198 = smul.addr %s194, 2
          %s199 = smul.addr %s198, 64
          %s200 = scalar_lea.hbm %s0, %s199
          %s201 = sshll.u32 %s193, 4
          %s202 = int_to_ptr.vmem [resolvable:$true] %s201
          %207 = dma.hbm_to_vmem [thread:$0]  %s200, 4096, %s202, %s190, 128, 128, 8
        $region20: #{tpu_custom_call.1} parent=15 // pred_fallthru
          _
        // Predicated region
        $region21: #{tpu_custom_call.1} parent=15 // pred_check
          %p208 = pneg %p81
        $region22: #{tpu_custom_call.1} parent=15 // pred_check_branch
          %210 = sbr.rel (%p208) target = $region24
        $region23: #{tpu_custom_call.1} parent=15 // pred_region
          %s211 = sand.u32 %s71, 1
          %s212 = scalar_lea.sflag [#allocation6], %s211
          %s213 = sand.u32 %s71, 1
          %s214 = smul.addr %s213, 128
          %s215 = scalar_lea.vmem [#allocation5], %s214
          %s217 = ssub.s32 2048, 2048
          %218 = vsyncadd %s212, %s217
          %s219 = smul.addr %s30, 64
          %s220 = scalar_lea.hbm %s1, %s219
          %s221 = sshll.u32 %s215, 4
          %s222 = int_to_ptr.vmem [resolvable:$true] %s221
          %227 = dma.hbm_to_vmem [thread:$0]  %s220, 2048, %s222, %s212, 128, 64, 4
        $region24: #{tpu_custom_call.1} parent=15 // pred_fallthru
          _
      $region16: #{tpu_custom_call.1} parent=5 // pred_fallthru
        _
      %p228 = scmp.le.s32.totalorder 1, %s23
      %p229 = scmp.lt.s32.totalorder %s23, 5
      %p230 = pnand %p228, %p229
      %p231 = pneg %p230
      // Predicated region
      $region25: #{tpu_custom_call.1} parent=5 // pred_check
        _
      $region26: #{tpu_custom_call.1} parent=5 // pred_check_branch
        %233 = sbr.rel (%p230) target = $region28
      $region27: #{tpu_custom_call.1} parent=5 // pred_region
        %s234 = ssub.s32 %s23, 1
        %s235 = sand.u32 %s48, 1
        %s236 = scalar_lea.sflag [#allocation3], %s235
        %s237 = sand.u32 %s48, 1
        %s238 = smul.addr %s237, 256
        %s239 = scalar_lea.vmem [#allocation2], %s238
        // Predicated region
        $region29: #{tpu_custom_call.1} parent=27 // pred_check
          %p240 = pneg %p61
        $region30: #{tpu_custom_call.1} parent=27 // pred_check_branch
          %242 = sbr.rel (%p240) target = $region32
        $region31: #{tpu_custom_call.1} parent=27 // pred_region
          %243 = dma.done %s236, 4096
        $region32: #{tpu_custom_call.1} parent=27 // pred_fallthru
          _
        %s244 = sand.u32 %s74, 1
        %s245 = scalar_lea.sflag [#allocation6], %s244
        %s246 = sand.u32 %s74, 1
        %s247 = smul.addr %s246, 128
        %s248 = scalar_lea.vmem [#allocation5], %s247
        // Predicated region
        $region33: #{tpu_custom_call.1} parent=27 // pred_check
          %p249 = pneg %p87
        $region34: #{tpu_custom_call.1} parent=27 // pred_check_branch
          %251 = sbr.rel (%p249) target = $region36
        $region35: #{tpu_custom_call.1} parent=27 // pred_region
          %252 = dma.done %s245, 2048
        $region36: #{tpu_custom_call.1} parent=27 // pred_fallthru
          _
        %s253 = sand.u32 %s48, 1
        %s254 = scalar_lea.sflag [#allocation3], %s253
        %s255 = sand.u32 %s48, 1
        %s256 = smul.addr %s255, 256
        %s257 = scalar_lea.vmem [#allocation2], %s256
        %p258 = pneg %p61
        %p259 = pneg %p58
        %s260 = sand.u32 %s74, 1
        %s261 = scalar_lea.sflag [#allocation6], %s260
        %s262 = sand.u32 %s74, 1
        %s263 = smul.addr %s262, 128
        %s264 = scalar_lea.vmem [#allocation5], %s263
        %p265 = pneg %p87
        %p266 = pneg %p84
        %p267 = pneg %p115
        %p268 = pneg %p112
        %s269 = sand.u32 %s102, 1
        %s270 = scalar_lea.sflag [#allocation4], %s269
        %s271 = sand.u32 %s102, 1
        %s272 = smul.addr %s271, 256
        %s273 = scalar_lea.vmem [#allocation7], %s272
        %p274 = pneg %p141
        %p275 = pneg %p138
        %s276 = sand.u32 %s28, 1
        %s277 = scalar_lea.sflag [#allocation9], %s276
        %s278 = sand.u32 %s128, 1
        %s279 = scalar_lea.vmem [#allocation8], %s278
        %p280 = pneg %p167
        %p281 = pneg %p164
        %s282 = sand.u32 %s28, 1
        %s283 = scalar_lea.sflag [#allocation9], %s282
        %s284 = sand.u32 %s154, 1
        %s285 = scalar_lea.vmem [#allocation10], %s284
        %s286 = smul.u32 32, %s33
        %s287 = smul.u32 32, %s33
        %v289 = vld [vmem:[%s239] sm:$0xff]
        %v290 = vld [vmem:[%s239 + $0x8] sm:$0xff]
        %v291 = vld [vmem:[%s239 + $0x10] sm:$0xff]
        %v292 = vld [vmem:[%s239 + $0x18] sm:$0xff]
        %v293 = vld [vmem:[%s239 + $0x20] sm:$0xff]
        %v294 = vld [vmem:[%s239 + $0x28] sm:$0xff]
        %v295 = vld [vmem:[%s239 + $0x30] sm:$0xff]
        %v296 = vld [vmem:[%s239 + $0x38] sm:$0xff]
        %v297 = vld [vmem:[%s239 + $0x40] sm:$0xff]
        %v298 = vld [vmem:[%s239 + $0x48] sm:$0xff]
        %v299 = vld [vmem:[%s239 + $0x50] sm:$0xff]
        %v300 = vld [vmem:[%s239 + $0x58] sm:$0xff]
        %v301 = vld [vmem:[%s239 + $0x60] sm:$0xff]
        %v302 = vld [vmem:[%s239 + $0x68] sm:$0xff]
        %v303 = vld [vmem:[%s239 + $0x70] sm:$0xff]
        %v304 = vld [vmem:[%s239 + $0x78] sm:$0xff]
        %v305 = vld [vmem:[%s239 + $0x80] sm:$0xff]
        %v306 = vld [vmem:[%s239 + $0x88] sm:$0xff]
        %v307 = vld [vmem:[%s239 + $0x90] sm:$0xff]
        %v308 = vld [vmem:[%s239 + $0x98] sm:$0xff]
        %v309 = vld [vmem:[%s239 + $0xa0] sm:$0xff]
        %v310 = vld [vmem:[%s239 + $0xa8] sm:$0xff]
        %v311 = vld [vmem:[%s239 + $0xb0] sm:$0xff]
        %v312 = vld [vmem:[%s239 + $0xb8] sm:$0xff]
        %v313 = vld [vmem:[%s239 + $0xc0] sm:$0xff]
        %v314 = vld [vmem:[%s239 + $0xc8] sm:$0xff]
        %v315 = vld [vmem:[%s239 + $0xd0] sm:$0xff]
        %v316 = vld [vmem:[%s239 + $0xd8] sm:$0xff]
        %v317 = vld [vmem:[%s239 + $0xe0] sm:$0xff]
        %v318 = vld [vmem:[%s239 + $0xe8] sm:$0xff]
        %v319 = vld [vmem:[%s239 + $0xf0] sm:$0xff]
        %v320 = vld [vmem:[%s239 + $0xf8] sm:$0xff]
        %v321 = vld [vmem:[%s248] sm:$0xf]
        %v322 = vld [vmem:[%s248 + $0x4] sm:$0xf]
        %v323 = vld [vmem:[%s248 + $0x8] sm:$0xf]
        %v324 = vld [vmem:[%s248 + $0xc] sm:$0xf]
        %v325 = vld [vmem:[%s248 + $0x10] sm:$0xf]
        %v326 = vld [vmem:[%s248 + $0x14] sm:$0xf]
        %v327 = vld [vmem:[%s248 + $0x18] sm:$0xf]
        %v328 = vld [vmem:[%s248 + $0x1c] sm:$0xf]
        %v329 = vld [vmem:[%s248 + $0x20] sm:$0xf]
        %v330 = vld [vmem:[%s248 + $0x24] sm:$0xf]
        %v331 = vld [vmem:[%s248 + $0x28] sm:$0xf]
        %v332 = vld [vmem:[%s248 + $0x2c] sm:$0xf]
        %v333 = vld [vmem:[%s248 + $0x30] sm:$0xf]
        %v334 = vld [vmem:[%s248 + $0x34] sm:$0xf]
        %v335 = vld [vmem:[%s248 + $0x38] sm:$0xf]
        %v336 = vld [vmem:[%s248 + $0x3c] sm:$0xf]
        %v337 = vld [vmem:[%s248 + $0x40] sm:$0xf]
        %v338 = vld [vmem:[%s248 + $0x44] sm:$0xf]
        %v339 = vld [vmem:[%s248 + $0x48] sm:$0xf]
        %v340 = vld [vmem:[%s248 + $0x4c] sm:$0xf]
        %v341 = vld [vmem:[%s248 + $0x50] sm:$0xf]
        %v342 = vld [vmem:[%s248 + $0x54] sm:$0xf]
        %v343 = vld [vmem:[%s248 + $0x58] sm:$0xf]
        %v344 = vld [vmem:[%s248 + $0x5c] sm:$0xf]
        %v345 = vld [vmem:[%s248 + $0x60] sm:$0xf]
        %v346 = vld [vmem:[%s248 + $0x64] sm:$0xf]
        %v347 = vld [vmem:[%s248 + $0x68] sm:$0xf]
        %v348 = vld [vmem:[%s248 + $0x6c] sm:$0xf]
        %v349 = vld [vmem:[%s248 + $0x70] sm:$0xf]
        %v350 = vld [vmem:[%s248 + $0x74] sm:$0xf]
        %v351 = vld [vmem:[%s248 + $0x78] sm:$0xf]
        %v352 = vld [vmem:[%s248 + $0x7c] sm:$0xf]
        %v385 = vunpack.c.l.b16 %v289
        %v386 = vunpack.c.h.b16 %v289
        %v387 = vunpack.c.l.b16 %v290
        %v388 = vunpack.c.h.b16 %v290
        %v389 = vunpack.c.l.b16 %v291
        %v390 = vunpack.c.h.b16 %v291
        %v391 = vunpack.c.l.b16 %v292
        %v392 = vunpack.c.h.b16 %v292
        %v393 = vunpack.c.l.b16 %v293
        %v394 = vunpack.c.h.b16 %v293
        %v395 = vunpack.c.l.b16 %v294
        %v396 = vunpack.c.h.b16 %v294
        %v397 = vunpack.c.l.b16 %v295
        %v398 = vunpack.c.h.b16 %v295
        %v399 = vunpack.c.l.b16 %v296
        %v400 = vunpack.c.h.b16 %v296
        %v401 = vunpack.c.l.b16 %v297
        %v402 = vunpack.c.h.b16 %v297
        %v403 = vunpack.c.l.b16 %v298
        %v404 = vunpack.c.h.b16 %v298
        %v405 = vunpack.c.l.b16 %v299
        %v406 = vunpack.c.h.b16 %v299
        %v407 = vunpack.c.l.b16 %v300
        %v408 = vunpack.c.h.b16 %v300
        %v409 = vunpack.c.l.b16 %v301
        %v410 = vunpack.c.h.b16 %v301
        %v411 = vunpack.c.l.b16 %v302
        %v412 = vunpack.c.h.b16 %v302
        %v413 = vunpack.c.l.b16 %v303
        %v414 = vunpack.c.h.b16 %v303
        %v415 = vunpack.c.l.b16 %v304
        %v416 = vunpack.c.h.b16 %v304
        %v417 = vunpack.c.l.b16 %v305
        %v418 = vunpack.c.h.b16 %v305
        %v419 = vunpack.c.l.b16 %v306
        %v420 = vunpack.c.h.b16 %v306
        %v421 = vunpack.c.l.b16 %v307
        %v422 = vunpack.c.h.b16 %v307
        %v423 = vunpack.c.l.b16 %v308
        %v424 = vunpack.c.h.b16 %v308
        %v425 = vunpack.c.l.b16 %v309
        %v426 = vunpack.c.h.b16 %v309
        %v427 = vunpack.c.l.b16 %v310
        %v428 = vunpack.c.h.b16 %v310
        %v429 = vunpack.c.l.b16 %v311
        %v430 = vunpack.c.h.b16 %v311
        %v431 = vunpack.c.l.b16 %v312
        %v432 = vunpack.c.h.b16 %v312
        %v433 = vunpack.c.l.b16 %v313
        %v434 = vunpack.c.h.b16 %v313
        %v435 = vunpack.c.l.b16 %v314
        %v436 = vunpack.c.h.b16 %v314
        %v437 = vunpack.c.l.b16 %v315
        %v438 = vunpack.c.h.b16 %v315
        %v439 = vunpack.c.l.b16 %v316
        %v440 = vunpack.c.h.b16 %v316
        %v441 = vunpack.c.l.b16 %v317
        %v442 = vunpack.c.h.b16 %v317
        %v443 = vunpack.c.l.b16 %v318
        %v444 = vunpack.c.h.b16 %v318
        %v445 = vunpack.c.l.b16 %v319
        %v446 = vunpack.c.h.b16 %v319
        %v447 = vunpack.c.l.b16 %v320
        %v448 = vunpack.c.h.b16 %v320
        %v449 = vpack.c.b16 %v387, %v385
        %v450 = vpack.c.b16 %v388, %v386
        %v451 = vpack.c.b16 %v391, %v389
        %v452 = vpack.c.b16 %v392, %v390
        %v453 = vpack.c.b16 %v395, %v393
        %v454 = vpack.c.b16 %v396, %v394
        %v455 = vpack.c.b16 %v399, %v397
        %v456 = vpack.c.b16 %v400, %v398
        %v457 = vpack.c.b16 %v403, %v401
        %v458 = vpack.c.b16 %v404, %v402
        %v459 = vpack.c.b16 %v407, %v405
        %v460 = vpack.c.b16 %v408, %v406
        %v461 = vpack.c.b16 %v411, %v409
        %v462 = vpack.c.b16 %v412, %v410
        %v463 = vpack.c.b16 %v415, %v413
        %v464 = vpack.c.b16 %v416, %v414
        %v465 = vpack.c.b16 %v419, %v417
        %v466 = vpack.c.b16 %v420, %v418
        %v467 = vpack.c.b16 %v423, %v421
        %v468 = vpack.c.b16 %v424, %v422
        %v469 = vpack.c.b16 %v427, %v425
        %v470 = vpack.c.b16 %v428, %v426
        %v471 = vpack.c.b16 %v431, %v429
        %v472 = vpack.c.b16 %v432, %v430
        %v473 = vpack.c.b16 %v435, %v433
        %v474 = vpack.c.b16 %v436, %v434
        %v475 = vpack.c.b16 %v439, %v437
        %v476 = vpack.c.b16 %v440, %v438
        %v477 = vpack.c.b16 %v443, %v441
        %v478 = vpack.c.b16 %v444, %v442
        %v479 = vpack.c.b16 %v447, %v445
        %v480 = vpack.c.b16 %v448, %v446
        %v545 = vunpack.c.l.b16 %v321
        %v546 = vunpack.c.l.b16 %v322
        %v547 = vunpack.c.l.b16 %v323
        %v548 = vunpack.c.l.b16 %v324
        %v549 = vunpack.c.l.b16 %v325
        %v550 = vunpack.c.l.b16 %v326
        %v551 = vunpack.c.l.b16 %v327
        %v552 = vunpack.c.l.b16 %v328
        %v553 = vunpack.c.l.b16 %v329
        %v554 = vunpack.c.l.b16 %v330
        %v555 = vunpack.c.l.b16 %v331
        %v556 = vunpack.c.l.b16 %v332
        %v557 = vunpack.c.l.b16 %v333
        %v558 = vunpack.c.l.b16 %v334
        %v559 = vunpack.c.l.b16 %v335
        %v560 = vunpack.c.l.b16 %v336
        %v561 = vunpack.c.l.b16 %v337
        %v562 = vunpack.c.l.b16 %v338
        %v563 = vunpack.c.l.b16 %v339
        %v564 = vunpack.c.l.b16 %v340
        %v565 = vunpack.c.l.b16 %v341
        %v566 = vunpack.c.l.b16 %v342
        %v567 = vunpack.c.l.b16 %v343
        %v568 = vunpack.c.l.b16 %v344
        %v569 = vunpack.c.l.b16 %v345
        %v570 = vunpack.c.l.b16 %v346
        %v571 = vunpack.c.l.b16 %v347
        %v572 = vunpack.c.l.b16 %v348
        %v573 = vunpack.c.l.b16 %v349
        %v574 = vunpack.c.l.b16 %v350
        %v575 = vunpack.c.l.b16 %v351
        %v576 = vunpack.c.l.b16 %v352
        %v577 = vpack.c.b16 %v546, %v545
        %v578 = vpack.c.b16 %v548, %v547
        %v579 = vpack.c.b16 %v550, %v549
        %v580 = vpack.c.b16 %v552, %v551
        %v581 = vpack.c.b16 %v554, %v553
        %v582 = vpack.c.b16 %v556, %v555
        %v583 = vpack.c.b16 %v558, %v557
        %v584 = vpack.c.b16 %v560, %v559
        %v585 = vpack.c.b16 %v562, %v561
        %v586 = vpack.c.b16 %v564, %v563
        %v587 = vpack.c.b16 %v566, %v565
        %v588 = vpack.c.b16 %v568, %v567
        %v589 = vpack.c.b16 %v570, %v569
        %v590 = vpack.c.b16 %v572, %v571
        %v591 = vpack.c.b16 %v574, %v573
        %v592 = vpack.c.b16 %v576, %v575
        %609 = vmatprep.subr.bf16.mxu0 0
        %610 = vmatpush1.bf16.msra.mxu0 %v577
        %611 = vmatprep.subr.bf16.mxu0 0
        %612 = vmatpush1.bf16.msra.mxu0 %v578
        %613 = vmatprep.subr.bf16.mxu0 0
        %614 = vmatpush1.bf16.msra.mxu0 %v579
        %615 = vmatprep.subr.bf16.mxu0 0
        %616 = vmatpush1.bf16.msra.mxu0 %v580
        %617 = vmatprep.subr.bf16.mxu0 0
        %618 = vmatpush1.bf16.msra.mxu0 %v581
        %619 = vmatprep.subr.bf16.mxu0 0
        %620 = vmatpush1.bf16.msra.mxu0 %v582
        %621 = vmatprep.subr.bf16.mxu0 0
        %622 = vmatpush1.bf16.msra.mxu0 %v583
        %623 = vmatprep.subr.bf16.mxu0 0
        %624 = vmatpush1.bf16.msra.mxu0 %v584
        %625 = vmatprep.subr.bf16.mxu0 0
        %626 = vmatpush1.bf16.msra.mxu0 %v585
        %627 = vmatprep.subr.bf16.mxu0 0
        %628 = vmatpush1.bf16.msra.mxu0 %v586
        %629 = vmatprep.subr.bf16.mxu0 0
        %630 = vmatpush1.bf16.msra.mxu0 %v587
        %631 = vmatprep.subr.bf16.mxu0 0
        %632 = vmatpush1.bf16.msra.mxu0 %v588
        %633 = vmatprep.subr.bf16.mxu0 0
        %634 = vmatpush1.bf16.msra.mxu0 %v589
        %635 = vmatprep.subr.bf16.mxu0 0
        %636 = vmatpush1.bf16.msra.mxu0 %v590
        %637 = vmatprep.subr.bf16.mxu0 0
        %638 = vmatpush1.bf16.msra.mxu0 %v591
        %639 = vmatprep.subr.bf16.mxu0 0
        %640 = vmatpush1.bf16.msra.mxu0 %v592
        %641 = vmatprep.mubr.bf16.mxu0 %v450
        %642 = vmatmul.mubr.bf16.gmra.mrb[0].mxu0 %v449
        %v643 = vpop.f32.mrb[0].mxu0
        %v644 = vadd.f32 0.0, %v643
        %v645 = vpop.f32.mrb[0].mxu0
        %v646 = vpop.f32.mrb[0].mxu0
        %v647 = vadd.f32 0.0, %v646
        %v648 = vpop.f32.mrb[0].mxu0
        %649 = vmatprep.mubr.bf16.mxu0 %v452
        %650 = vmatmul.mubr.bf16.gmra.mrb[0].mxu0 %v451
        %v651 = vpop.f32.mrb[0].mxu0
        %v652 = vadd.f32 0.0, %v651
        %v653 = vpop.f32.mrb[0].mxu0
        %v654 = vpop.f32.mrb[0].mxu0
        %v655 = vadd.f32 0.0, %v654
        %v656 = vpop.f32.mrb[0].mxu0
        %657 = vmatprep.mubr.bf16.mxu0 %v454
        %658 = vmatmul.mubr.bf16.gmra.mrb[0].mxu0 %v453
        %v659 = vpop.f32.mrb[0].mxu0
        %v660 = vadd.f32 0.0, %v659
        %v661 = vpop.f32.mrb[0].mxu0
        %v662 = vpop.f32.mrb[0].mxu0
        %v663 = vadd.f32 0.0, %v662
        %v664 = vpop.f32.mrb[0].mxu0
        %665 = vmatprep.mubr.bf16.mxu0 %v456
        %666 = vmatmul.mubr.bf16.gmra.mrb[0].mxu0 %v455
        %v667 = vpop.f32.mrb[0].mxu0
        %v668 = vadd.f32 0.0, %v667
        %v669 = vpop.f32.mrb[0].mxu0
        %v670 = vpop.f32.mrb[0].mxu0
        %v671 = vadd.f32 0.0, %v670
        %v672 = vpop.f32.mrb[0].mxu0
        %673 = vmatprep.mubr.bf16.mxu0 %v458
        %674 = vmatmul.mubr.bf16.gmra.mrb[0].mxu0 %v457
        %v675 = vpop.f32.mrb[0].mxu0
        %v676 = vadd.f32 0.0, %v675
        %v677 = vpop.f32.mrb[0].mxu0
        %v678 = vpop.f32.mrb[0].mxu0
        %v679 = vadd.f32 0.0, %v678
        %v680 = vpop.f32.mrb[0].mxu0
        %681 = vmatprep.mubr.bf16.mxu0 %v460
        %682 = vmatmul.mubr.bf16.gmra.mrb[0].mxu0 %v459
        %v683 = vpop.f32.mrb[0].mxu0
        %v684 = vadd.f32 0.0, %v683
        %v685 = vpop.f32.mrb[0].mxu0
        %v686 = vpop.f32.mrb[0].mxu0
        %v687 = vadd.f32 0.0, %v686
        %v688 = vpop.f32.mrb[0].mxu0
        %689 = vmatprep.mubr.bf16.mxu0 %v462
        %690 = vmatmul.mubr.bf16.gmra.mrb[0].mxu0 %v461
        %v691 = vpop.f32.mrb[0].mxu0
        %v692 = vadd.f32 0.0, %v691
        %v693 = vpop.f32.mrb[0].mxu0
        %v694 = vpop.f32.mrb[0].mxu0
        %v695 = vadd.f32 0.0, %v694
        %v696 = vpop.f32.mrb[0].mxu0
        %697 = vmatprep.mubr.bf16.mxu0 %v464
        %698 = vmatmul.mubr.bf16.gmra.mrb[0].mxu0 %v463
        %v699 = vpop.f32.mrb[0].mxu0
        %v700 = vadd.f32 0.0, %v699
        %v701 = vpop.f32.mrb[0].mxu0
        %v702 = vpop.f32.mrb[0].mxu0
        %v703 = vadd.f32 0.0, %v702
        %v704 = vpop.f32.mrb[0].mxu0
        %705 = vmatprep.mubr.bf16.mxu0 %v466
        %706 = vmatmul.mubr.bf16.gmra.mrb[0].mxu0 %v465
        %v707 = vpop.f32.mrb[0].mxu0
        %v708 = vadd.f32 0.0, %v707
        %v709 = vpop.f32.mrb[0].mxu0
        %v710 = vpop.f32.mrb[0].mxu0
        %v711 = vadd.f32 0.0, %v710
        %v712 = vpop.f32.mrb[0].mxu0
        %713 = vmatprep.mubr.bf16.mxu0 %v468
        %714 = vmatmul.mubr.bf16.gmra.mrb[0].mxu0 %v467
        %v715 = vpop.f32.mrb[0].mxu0
        %v716 = vadd.f32 0.0, %v715
        %v717 = vpop.f32.mrb[0].mxu0
        %v718 = vpop.f32.mrb[0].mxu0
        %v719 = vadd.f32 0.0, %v718
        %v720 = vpop.f32.mrb[0].mxu0
        %721 = vmatprep.mubr.bf16.mxu0 %v470
        %722 = vmatmul.mubr.bf16.gmra.mrb[0].mxu0 %v469
        %v723 = vpop.f32.mrb[0].mxu0
        %v724 = vadd.f32 0.0, %v723
        %v725 = vpop.f32.mrb[0].mxu0
        %v726 = vpop.f32.mrb[0].mxu0
        %v727 = vadd.f32 0.0, %v726
        %v728 = vpop.f32.mrb[0].mxu0
        %729 = vmatprep.mubr.bf16.mxu0 %v472
        %730 = vmatmul.mubr.bf16.gmra.mrb[0].mxu0 %v471
        %v731 = vpop.f32.mrb[0].mxu0
        %v732 = vadd.f32 0.0, %v731
        %v733 = vpop.f32.mrb[0].mxu0
        %v734 = vpop.f32.mrb[0].mxu0
        %v735 = vadd.f32 0.0, %v734
        %v736 = vpop.f32.mrb[0].mxu0
        %737 = vmatprep.mubr.bf16.mxu0 %v474
        %738 = vmatmul.mubr.bf16.gmra.mrb[0].mxu0 %v473
        %v739 = vpop.f32.mrb[0].mxu0
        %v740 = vadd.f32 0.0, %v739
        %v741 = vpop.f32.mrb[0].mxu0
        %v742 = vpop.f32.mrb[0].mxu0
        %v743 = vadd.f32 0.0, %v742
        %v744 = vpop.f32.mrb[0].mxu0
        %745 = vmatprep.mubr.bf16.mxu0 %v476
        %746 = vmatmul.mubr.bf16.gmra.mrb[0].mxu0 %v475
        %v747 = vpop.f32.mrb[0].mxu0
        %v748 = vadd.f32 0.0, %v747
        %v749 = vpop.f32.mrb[0].mxu0
        %v750 = vpop.f32.mrb[0].mxu0
        %v751 = vadd.f32 0.0, %v750
        %v752 = vpop.f32.mrb[0].mxu0
        %753 = vmatprep.mubr.bf16.mxu0 %v478
        %754 = vmatmul.mubr.bf16.gmra.mrb[0].mxu0 %v477
        %v755 = vpop.f32.mrb[0].mxu0
        %v756 = vadd.f32 0.0, %v755
        %v757 = vpop.f32.mrb[0].mxu0
        %v758 = vpop.f32.mrb[0].mxu0
        %v759 = vadd.f32 0.0, %v758
        %v760 = vpop.f32.mrb[0].mxu0
        %761 = vmatprep.mubr.bf16.mxu0 %v480
        %762 = vmatmul.mubr.bf16.gmra.mrb[0].mxu0 %v479
        %v763 = vpop.f32.mrb[0].mxu0
        %v764 = vadd.f32 0.0, %v763
        %v765 = vpop.f32.mrb[0].mxu0
        %v766 = vpop.f32.mrb[0].mxu0
        %v767 = vadd.f32 0.0, %v766
        %v768 = vpop.f32.mrb[0].mxu0
        %769 = vdwg.mxu0
        %770 = vst [vmem:[%s273] sm:$0xff] %v644
        %771 = vst [vmem:[%s273 + $0x8] sm:$0xff] %v647
        %772 = vst [vmem:[%s273 + $0x10] sm:$0xff] %v652
        %773 = vst [vmem:[%s273 + $0x18] sm:$0xff] %v655
        %774 = vst [vmem:[%s273 + $0x20] sm:$0xff] %v660
        %775 = vst [vmem:[%s273 + $0x28] sm:$0xff] %v663
        %776 = vst [vmem:[%s273 + $0x30] sm:$0xff] %v668
        %777 = vst [vmem:[%s273 + $0x38] sm:$0xff] %v671
        %778 = vst [vmem:[%s273 + $0x40] sm:$0xff] %v676
        %779 = vst [vmem:[%s273 + $0x48] sm:$0xff] %v679
        %780 = vst [vmem:[%s273 + $0x50] sm:$0xff] %v684
        %781 = vst [vmem:[%s273 + $0x58] sm:$0xff] %v687
        %782 = vst [vmem:[%s273 + $0x60] sm:$0xff] %v692
        %783 = vst [vmem:[%s273 + $0x68] sm:$0xff] %v695
        %784 = vst [vmem:[%s273 + $0x70] sm:$0xff] %v700
        %785 = vst [vmem:[%s273 + $0x78] sm:$0xff] %v703
        %786 = vst [vmem:[%s273 + $0x80] sm:$0xff] %v708
        %787 = vst [vmem:[%s273 + $0x88] sm:$0xff] %v711
        %788 = vst [vmem:[%s273 + $0x90] sm:$0xff] %v716
        %789 = vst [vmem:[%s273 + $0x98] sm:$0xff] %v719
        %790 = vst [vmem:[%s273 + $0xa0] sm:$0xff] %v724
        %791 = vst [vmem:[%s273 + $0xa8] sm:$0xff] %v727
        %792 = vst [vmem:[%s273 + $0xb0] sm:$0xff] %v732
        %793 = vst [vmem:[%s273 + $0xb8] sm:$0xff] %v735
        %794 = vst [vmem:[%s273 + $0xc0] sm:$0xff] %v740
        %795 = vst [vmem:[%s273 + $0xc8] sm:$0xff] %v743
        %796 = vst [vmem:[%s273 + $0xd0] sm:$0xff] %v748
        %797 = vst [vmem:[%s273 + $0xd8] sm:$0xff] %v751
        %798 = vst [vmem:[%s273 + $0xe0] sm:$0xff] %v756
        %799 = vst [vmem:[%s273 + $0xe8] sm:$0xff] %v759
        %800 = vst [vmem:[%s273 + $0xf0] sm:$0xff] %v764
        %801 = vst [vmem:[%s273 + $0xf8] sm:$0xff] %v767
        %p802 = scmp.eq.s32.totalorder %s33, 0
        // Predicated region
        $region37: #{tpu_custom_call.1} parent=27 // pred_check
          %p803 = pneg %p802
        $region38: #{tpu_custom_call.1} parent=27 // pred_check_branch
          %805 = sbr.rel (%p803) target = $region40
        $region39: #{tpu_custom_call.1} parent=27 // pred_region
          %806 = vst [vmem:[%s279] sm:$0x1] 0.0
          %807 = vst [vmem:[%s285] sm:$0x1] 0.0
        $region40: #{tpu_custom_call.1} parent=27 // pred_fallthru
          _
        %v808 = vld [vmem:[%s279] sm:$0x1]
        %v809 = vadd.f32 %v644, %v647
        %v810 = vadd.f32 %v809, %v652
        %v811 = vadd.f32 %v810, %v655
        %v812 = vadd.f32 %v811, %v660
        %v813 = vadd.f32 %v812, %v663
        %v814 = vadd.f32 %v813, %v668
        %v815 = vadd.f32 %v814, %v671
        %v816 = vadd.f32 %v815, %v676
        %v817 = vadd.f32 %v816, %v679
        %v818 = vadd.f32 %v817, %v684
        %v819 = vadd.f32 %v818, %v687
        %v820 = vadd.f32 %v819, %v692
        %v821 = vadd.f32 %v820, %v695
        %v822 = vadd.f32 %v821, %v700
        %v823 = vadd.f32 %v822, %v703
        %v824 = vadd.f32 %v823, %v708
        %v825 = vadd.f32 %v824, %v711
        %v826 = vadd.f32 %v825, %v716
        %v827 = vadd.f32 %v826, %v719
        %v828 = vadd.f32 %v827, %v724
        %v829 = vadd.f32 %v828, %v727
        %v830 = vadd.f32 %v829, %v732
        %v831 = vadd.f32 %v830, %v735
        %v832 = vadd.f32 %v831, %v740
        %v833 = vadd.f32 %v832, %v743
        %v834 = vadd.f32 %v833, %v748
        %v835 = vadd.f32 %v834, %v751
        %v836 = vadd.f32 %v835, %v756
        %v837 = vadd.f32 %v836, %v759
        %v838 = vadd.f32 %v837, %v764
        %v839 = vadd.f32 %v838, %v767
        %v840 = vrot.slane %v839, 4
        %v841 = vadd.f32 %v839, %v840
        %v842 = vrot.slane %v841, 2
        %v843 = vadd.f32 %v841, %v842
        %v844 = vrot.slane %v843, 1
        %v845 = vadd.f32 %v843, %v844
        %v846 = vadd.f32 %v808, %v845
        %847 = vst [vmem:[%s279] sm:$0x1] %v846
        %v848 = vld [vmem:[%s285] sm:$0x1]
        %v849 = vmul.f32 %v644, %v644
        %v850 = vmul.f32 %v647, %v647
        %v851 = vmul.f32 %v652, %v652
        %v852 = vmul.f32 %v655, %v655
        %v853 = vmul.f32 %v660, %v660
        %v854 = vmul.f32 %v663, %v663
        %v855 = vmul.f32 %v668, %v668
        %v856 = vmul.f32 %v671, %v671
        %v857 = vmul.f32 %v676, %v676
        %v858 = vmul.f32 %v679, %v679
        %v859 = vmul.f32 %v684, %v684
        %v860 = vmul.f32 %v687, %v687
        %v861 = vmul.f32 %v692, %v692
        %v862 = vmul.f32 %v695, %v695
        %v863 = vmul.f32 %v700, %v700
        %v864 = vmul.f32 %v703, %v703
        %v865 = vmul.f32 %v708, %v708
        %v866 = vmul.f32 %v711, %v711
        %v867 = vmul.f32 %v716, %v716
        %v868 = vmul.f32 %v719, %v719
        %v869 = vmul.f32 %v724, %v724
        %v870 = vmul.f32 %v727, %v727
        %v871 = vmul.f32 %v732, %v732
        %v872 = vmul.f32 %v735, %v735
        %v873 = vmul.f32 %v740, %v740
        %v874 = vmul.f32 %v743, %v743
        %v875 = vmul.f32 %v748, %v748
        %v876 = vmul.f32 %v751, %v751
        %v877 = vmul.f32 %v756, %v756
        %v878 = vmul.f32 %v759, %v759
        %v879 = vmul.f32 %v764, %v764
        %v880 = vmul.f32 %v767, %v767
        %v881 = vadd.f32 %v849, %v850
        %v882 = vadd.f32 %v881, %v851
        %v883 = vadd.f32 %v882, %v852
        %v884 = vadd.f32 %v883, %v853
        %v885 = vadd.f32 %v884, %v854
        %v886 = vadd.f32 %v885, %v855
        %v887 = vadd.f32 %v886, %v856
        %v888 = vadd.f32 %v887, %v857
        %v889 = vadd.f32 %v888, %v858
        %v890 = vadd.f32 %v889, %v859
        %v891 = vadd.f32 %v890, %v860
        %v892 = vadd.f32 %v891, %v861
        %v893 = vadd.f32 %v892, %v862
        %v894 = vadd.f32 %v893, %v863
        %v895 = vadd.f32 %v894, %v864
        %v896 = vadd.f32 %v895, %v865
        %v897 = vadd.f32 %v896, %v866
        %v898 = vadd.f32 %v897, %v867
        %v899 = vadd.f32 %v898, %v868
        %v900 = vadd.f32 %v899, %v869
        %v901 = vadd.f32 %v900, %v870
        %v902 = vadd.f32 %v901, %v871
        %v903 = vadd.f32 %v902, %v872
        %v904 = vadd.f32 %v903, %v873
        %v905 = vadd.f32 %v904, %v874
        %v906 = vadd.f32 %v905, %v875
        %v907 = vadd.f32 %v906, %v876
        %v908 = vadd.f32 %v907, %v877
        %v909 = vadd.f32 %v908, %v878
        %v910 = vadd.f32 %v909, %v879
        %v911 = vadd.f32 %v910, %v880
        %v912 = vrot.slane %v911, 4
        %v913 = vadd.f32 %v911, %v912
        %v914 = vrot.slane %v913, 2
        %v915 = vadd.f32 %v913, %v914
        %v916 = vrot.slane %v915, 1
        %v917 = vadd.f32 %v915, %v916
        %v918 = vadd.f32 %v848, %v917
        %919 = vst [vmem:[%s285] sm:$0x1] %v918
        %s920 = sand.u32 %s102, 1
        %s921 = scalar_lea.sflag [#allocation4], %s920
        %s922 = sand.u32 %s102, 1
        %s923 = smul.addr %s922, 256
        %s924 = scalar_lea.vmem [#allocation7], %s923
        %s925 = sand.u32 %s28, 1
        %s926 = scalar_lea.sflag [#allocation9], %s925
        %s927 = sand.u32 %s128, 1
        %s928 = scalar_lea.vmem [#allocation8], %s927
        %s929 = sand.u32 %s28, 1
        %s930 = scalar_lea.sflag [#allocation9], %s929
        %s931 = sand.u32 %s154, 1
        %s932 = scalar_lea.vmem [#allocation10], %s931
        // Predicated region
        $region41: #{tpu_custom_call.1} parent=27 // pred_check
          %p933 = pneg %p112
        $region42: #{tpu_custom_call.1} parent=27 // pred_check_branch
          %935 = sbr.rel (%p933) target = $region44
        $region43: #{tpu_custom_call.1} parent=27 // pred_region
          %s936 = smul.u32 32, %s33
          %s938 = ssub.s32 4096, 4096
          %939 = vsyncadd %s921, %s938
          %s940 = smul.addr %s936, 2
          %s941 = sadd.s32 %s32, %s940
          %s942 = smul.addr %s941, 128
          %s943 = scalar_lea.hbm %s2, %s942
          %s944 = sshll.u32 %s924, 4
          %s945 = int_to_ptr.vmem [resolvable:$true] %s944
          %950 = dma.vmem_to_hbm [thread:$0]  %s945, 4096, %s943, %s921, 128, 256, 8
        $region44: #{tpu_custom_call.1} parent=27 // pred_fallthru
          _
        // Predicated region
        $region45: #{tpu_custom_call.1} parent=27 // pred_check
          %p951 = pneg %p138
        $region46: #{tpu_custom_call.1} parent=27 // pred_check_branch
          %953 = sbr.rel (%p951) target = $region48
        $region47: #{tpu_custom_call.1} parent=27 // pred_region
          %s955 = ssub.s32 16, 16
          %956 = vsyncadd %s926, %s955
          %s957 = smul.addr %s32, 16
          %s958 = scalar_lea.hbm %s3, %s957
          %s960 = sshll.u32 %s928, 4
          %s961 = int_to_ptr.vmem [resolvable:$true] %s960
          %963 = dma.vmem_to_hbm [thread:$0]  %s961, 16, %s958, %s926
        $region48: #{tpu_custom_call.1} parent=27 // pred_fallthru
          _
        // Predicated region
        $region49: #{tpu_custom_call.1} parent=27 // pred_check
          %p964 = pneg %p164
        $region50: #{tpu_custom_call.1} parent=27 // pred_check_branch
          %966 = sbr.rel (%p964) target = $region52
        $region51: #{tpu_custom_call.1} parent=27 // pred_region
          %s968 = ssub.s32 16, 16
          %969 = vsyncadd %s930, %s968
          %s970 = smul.addr %s32, 16
          %s971 = scalar_lea.hbm %s4, %s970
          %s973 = sshll.u32 %s932, 4
          %s974 = int_to_ptr.vmem [resolvable:$true] %s973
          %976 = dma.vmem_to_hbm [thread:$0]  %s974, 16, %s971, %s930
        $region52: #{tpu_custom_call.1} parent=27 // pred_fallthru
          _
      $region28: #{tpu_custom_call.1} parent=5 // pred_fallthru
        _
      %p977 = scmp.le.s32.totalorder 2, %s23
      // Predicated region
      $region53: #{tpu_custom_call.1} parent=5 // pred_check
        %p978 = pneg %p977
      $region54: #{tpu_custom_call.1} parent=5 // pred_check_branch
        %980 = sbr.rel (%p978) target = $region56
      $region55: #{tpu_custom_call.1} parent=5 // pred_region
        %s981 = ssub.s32 %s23, 2
        // Predicated region
        $region57: #{tpu_custom_call.1} parent=55 // pred_check
          %p982 = pneg %p118
        $region58: #{tpu_custom_call.1} parent=55 // pred_check_branch
          %984 = sbr.rel (%p982) target = $region60
        $region59: #{tpu_custom_call.1} parent=55 // pred_region
          %s985 = sand.u32 %s103, 1
          %s986 = scalar_lea.sflag [#allocation4], %s985
          %s987 = sand.u32 %s103, 1
          %s988 = smul.addr %s987, 256
          %s989 = scalar_lea.vmem [#allocation7], %s988
          %990 = dma.done %s986, 4096
        $region60: #{tpu_custom_call.1} parent=55 // pred_fallthru
          _
        // Predicated region
        $region61: #{tpu_custom_call.1} parent=55 // pred_check
          %p991 = pneg %p144
        $region62: #{tpu_custom_call.1} parent=55 // pred_check_branch
          %993 = sbr.rel (%p991) target = $region64
        $region63: #{tpu_custom_call.1} parent=55 // pred_region
          %s994 = sand.u32 %s29, 1
          %s995 = scalar_lea.sflag [#allocation9], %s994
          %s996 = sand.u32 %s129, 1
          %s997 = scalar_lea.vmem [#allocation8], %s996
          %998 = dma.done %s995, 16
        $region64: #{tpu_custom_call.1} parent=55 // pred_fallthru
          _
        // Predicated region
        $region65: #{tpu_custom_call.1} parent=55 // pred_check
          %p999 = pneg %p170
        $region66: #{tpu_custom_call.1} parent=55 // pred_check_branch
          %1001 = sbr.rel (%p999) target = $region68
        $region67: #{tpu_custom_call.1} parent=55 // pred_region
          %s1002 = sand.u32 %s29, 1
          %s1003 = scalar_lea.sflag [#allocation9], %s1002
          %s1004 = sand.u32 %s155, 1
          %s1005 = scalar_lea.vmem [#allocation10], %s1004
          %1006 = dma.done %s1003, 16
        $region68: #{tpu_custom_call.1} parent=55 // pred_fallthru
          _
      $region56: #{tpu_custom_call.1} parent=5 // pred_fallthru
        _
    $region6: #{tpu_custom_call.1} parent=1 // loop_footer
      %s27 = sadd.s32 1, %s23
    $region7: #{tpu_custom_call.1} parent=1 // loop_footer_branch
      %22 = sbr.rel target = $region3
    $region8: #{tpu_custom_call.1} parent=1 // loop_exit
      _
    %1007 = vsyncpa [#allocation3], 1
    %s1008 = scalar_lea.sflag [#allocation3], 1
    %1009 = vsyncpa %s1008, 1
    %1010 = vsyncpa [#allocation6], 1
    %s1011 = scalar_lea.sflag [#allocation6], 1
    %1012 = vsyncpa %s1011, 1
    %1013 = vsyncpa [#allocation4], 1
    %s1014 = scalar_lea.sflag [#allocation4], 1
    %1015 = vsyncpa %s1014, 1
    %1016 = vsyncpa [#allocation9], 1
    %s1017 = scalar_lea.sflag [#allocation9], 1
    %1018 = vsyncpa %s1017, 1

</llo_original>
